<compile_context>
chip_gen: v5e
topology: v5e:2x2
jax: 0.10.0
libtpu: 0.0.40
codegen_flags: <defaults>
</compile_context>

<pallas_src>
import functools

import numpy as np
import jax
import jax.numpy as jnp
from jax.experimental import pallas as pl
from jax.experimental.pallas import tpu as pltpu

HIDDEN = 32                      # hidden_dim (small, synthetic)
NUM_LEVELS = 2
NUM_CLASSES = 3
SPACE = 16
STRIDES = [2 ** (i + 2) for i in range(NUM_LEVELS)]   # [4, 8]
LANE = 128                       # TPU lane width; all kernel outputs padded to this

_VMEM_CACHE = None


def _vmem_limit():
    """Generation-aware scoped-VMEM limit: ~80% of physical (v5e/v6e ~102MiB,
    v7x ~51MiB), with a 32 MiB fallback if the query is unavailable."""
    global _VMEM_CACHE
    if _VMEM_CACHE is None:
        limit = 32 * 1024 * 1024
        try:
            info_fn = getattr(pltpu, "get_tpu_info", None)
            if info_fn is not None:
                cap = getattr(info_fn(), "vmem_capacity_bytes", None)
                if cap:
                    limit = min(int(cap * 0.8), int(cap) - (8 << 20))
        except Exception:
            pass
        _VMEM_CACHE = max(limit, 16 * 1024 * 1024)
    return _VMEM_CACHE


def _round_up(x, m):
    return ((x + m - 1) // m) * m


def _row_tiling(n, tile):
    npad = _round_up(n, 8)
    tn = min(_round_up(tile, 8), npad)
    return _round_up(npad, tn), tn


# --------------------------------------------------------------------------
# Pallas kernel 1: row-tiled 3x3 conv, 3 long-K MXU matmuls (one per dy).
# --------------------------------------------------------------------------
def _conv3x3_kernel(xm_ref, xh_ref, w_ref, b_ref, o_ref):
    # xm_ref: (1, TH, W+2, Cin)  bf16, main rows of the zero-padded map
    # xh_ref: (1, 2,  W+2, Cin)  bf16, 2-row bottom halo of this tile
    # w_ref : (3, 3*Cin, 128)    bf16, per-dy (dx, cin)-major weights (Cout padded)
    # b_ref : (1, 128)           f32
    # o_ref : (1, TH*W, 128)     bf16, lane-dense
    _, th, wpad, cin = xm_ref.shape
    w = wpad - 2
    coutp = w_ref.shape[-1]
    xp = jnp.concatenate([xm_ref[0], xh_ref[0]], axis=0)        # (TH+2, W+2, Cin)
    acc = jnp.zeros((th * w, coutp), jnp.float32)
    for dy in range(3):   # 3 matmuls, K=3*Cin -> cols slab is 3x input, not 9x
        cols = jnp.concatenate(
            [xp[dy:dy + th, dx:dx + w, :].reshape(th * w, cin) for dx in range(3)],
            axis=-1)                                             # (TH*W, 3*Cin) bf16
        acc = acc + jnp.dot(cols, w_ref[dy],
                            preferred_element_type=jnp.float32)
    o_ref[0] = (acc + b_ref[...]).astype(o_ref.dtype)            # bias in f32


def conv3x3(x_bf16, w_pad, b_pad, tile_h=64):
    """3x3 'SAME' conv.  x: (B,H,W,Cin) bf16, w_pad: (3,3*Cin,LANE) bf16,
    b_pad: (1,LANE) f32.  Returns (B, H*W, LANE) bf16 (zero-padded channels)."""
    B, H, W, Cin = x_bf16.shape
    assert H % 2 == 0, "even feature height assumed (stride-4 features)"
    assert w_pad.shape == (3, 3 * Cin, LANE)
    th = max(2, min(tile_h, H))
    while H % th or th % 2:          # largest even row tile dividing H
        th -= 1
    # TODO(synk): the 1-px zero pad still materializes one extra copy of the
    # fused map in HBM; folding it into the kernel (clamped index_map + edge
    # zero fill) would save one HBM read+write at production resolution.
    xp = jnp.pad(x_bf16, ((0, 0), (1, 1), (1, 1), (0, 0)))
    out = pl.pallas_call(
        _conv3x3_kernel,
        out_shape=jax.ShapeDtypeStruct((B, H * W, LANE), jnp.bfloat16),
        grid=(B, H // th),
        in_specs=[
            # main rows of this tile: padded rows [i*th, i*th+th)
            pl.BlockSpec((1, th, W + 2, Cin), lambda b, i: (b, i, 0, 0)),
            # 2-row halo: padded rows [(i+1)*th, (i+1)*th+2)
            pl.BlockSpec((1, 2, W + 2, Cin),
                         lambda b, i: (b, (i + 1) * (th // 2), 0, 0)),
            pl.BlockSpec((3, 3 * Cin, LANE), lambda b, i: (0, 0, 0)),
            pl.BlockSpec((1, LANE), lambda b, i: (0, 0)),
        ],
        out_specs=pl.BlockSpec((1, th * W, LANE), lambda b, i: (b, i, 0)),
        compiler_params=pltpu.CompilerParams(
            dimension_semantics=("parallel", "parallel"),
            vmem_limit_bytes=_vmem_limit()),
    )(xp, xp, w_pad, b_pad)
    return out


# --------------------------------------------------------------------------
# Pallas kernels 2/3: fused (bilinear sampling -> 2-layer MLP head).
# Dropout == identity (eval).  bf16 MXU operands, f32 bias/ReLU, 128-lane out.
# --------------------------------------------------------------------------
def _mlp_tail(roi_f32, w1_ref, b1_ref, w2_ref, b2_ref, o_ref):
    h = jnp.dot(roi_f32.astype(jnp.bfloat16), w1_ref[...],
                preferred_element_type=jnp.float32) + b1_ref[...]
    h = jnp.maximum(h, 0.0)                                      # ReLU (f32)
    o_ref[0] = (jnp.dot(h.astype(jnp.bfloat16), w2_ref[...],
                        preferred_element_type=jnp.float32)
                + b2_ref[...]).astype(o_ref.dtype)


def _interp_mlp_kernel(wm_ref, feat_ref, w1_ref, b1_ref, w2_ref, b2_ref, o_ref):
    # stage 1: precomputed (static anchor grid) interp matrix -> one MXU gather
    roi = jnp.dot(wm_ref[...], feat_ref[0], preferred_element_type=jnp.float32)
    _mlp_tail(roi, w1_ref, b1_ref, w2_ref, b2_ref, o_ref)


def _sample_mlp_kernel(prop_ref, feat_ref, w1_ref, b1_ref, w2_ref, b2_ref, o_ref,
                       *, hf, wf, stride):
    # stage 2: build the bilinear interp matrix in-kernel from proposal coords
    # (zeros padding; align_corners=False mapping).
    # TODO(synk): the truncated reference never shows its grid_sample args;
    # align_corners / padding_mode here follow the F.grid_sample defaults.
    props = prop_ref[0]                                          # (tn, 2) f32
    tn = props.shape[0]
    fx = props[:, 0:1] * (1.0 / stride) - 0.5
    fy = props[:, 1:2] * (1.0 / stride) - 0.5
    x0 = jnp.floor(fx)
    y0 = jnp.floor(fy)
    wx = fx - x0
    wy = fy - y0
    x0 = x0.astype(jnp.int32)
    y0 = y0.astype(jnp.int32)
    lane_idx = jax.lax.broadcasted_iota(jnp.int32, (tn, hf * wf), 1)
    wmat = jnp.zeros((tn, hf * wf), jnp.float32)
    for dy in (0, 1):
        for dx in (0, 1):
            xi = x0 + dx
            yi = y0 + dy
            w = (wx if dx else 1.0 - wx) * (wy if dy else 1.0 - wy)
            valid = (xi >= 0) & (xi < wf) & (yi >= 0) & (yi < hf)
            w = jnp.where(valid, w, 0.0)                         # zeros padding
            wmat = wmat + jnp.where(lane_idx == yi * wf + xi, w, 0.0)
    roi = jnp.dot(wmat.astype(jnp.bfloat16), feat_ref[0],
                  preferred_element_type=jnp.float32)            # (tn, C)
    _mlp_tail(roi, w1_ref, b1_ref, w2_ref, b2_ref, o_ref)


def interp_mlp(wmat_np, feat, mlp_params, tile_n=2048):
    """Stage-1 head: precomputed interp matrix (numpy, constant) @ feat -> MLP."""
    w1, b1, w2, b2 = mlp_params
    B, HW, C = feat.shape
    assert C == LANE and wmat_np.shape[1] == HW
    N = wmat_np.shape[0]
    Np, tn = _row_tiling(N, tile_n)
    wm = np.zeros((Np, HW), np.float32)
    wm[:N] = wmat_np
    wm = jnp.asarray(wm).astype(jnp.bfloat16)
    # TODO(synk): for very large feature maps, also tile the HW axis of `feat`
    # (chunked interp matmul) instead of keeping the whole map resident.
    return pl.pallas_call(
        _interp_mlp_kernel,
        out_shape=jax.ShapeDtypeStruct((B, Np, LANE), jnp.float32),
        grid=(B, Np // tn),
        in_specs=[
            pl.BlockSpec((tn, HW), lambda b, n: (n, 0)),
            pl.BlockSpec((1, HW, LANE), lambda b, n: (b, 0, 0)),
            pl.BlockSpec((LANE, LANE), lambda b, n: (0, 0)),
            pl.BlockSpec((1, LANE), lambda b, n: (0, 0)),
            pl.BlockSpec((LANE, LANE), lambda b, n: (0, 0)),
            pl.BlockSpec((1, LANE), lambda b, n: (0, 0)),
        ],
        out_specs=pl.BlockSpec((1, tn, LANE), lambda b, n: (b, n, 0)),
        compiler_params=pltpu.CompilerParams(
            dimension_semantics=("parallel", "parallel"),
            vmem_limit_bytes=_vmem_limit()),
    )(wm, feat, w1, b1, w2, b2)


def sample_mlp(proposals, feat, mlp_params, hf, wf, stride, tile_n=2048):
    """Stage-2 head: in-kernel bilinear sampling (one-hot MXU matmul) -> MLP."""
    w1, b1, w2, b2 = mlp_params
    B, N, _ = proposals.shape
    assert feat.shape == (B, hf * wf, LANE)
    Np, tn = _row_tiling(N, tile_n)
    props = jnp.pad(proposals, ((0, 0), (0, Np - N), (0, 0)))
    kern = functools.partial(_sample_mlp_kernel, hf=hf, wf=wf, stride=float(stride))
    return pl.pallas_call(
        kern,
        out_shape=jax.ShapeDtypeStruct((B, Np, LANE), jnp.float32),
        grid=(B, Np // tn),
        in_specs=[
            pl.BlockSpec((1, tn, 2), lambda b, n: (b, n, 0)),
            pl.BlockSpec((1, hf * wf, LANE), lambda b, n: (b, 0, 0)),
            pl.BlockSpec((LANE, LANE), lambda b, n: (0, 0)),
            pl.BlockSpec((1, LANE), lambda b, n: (0, 0)),
            pl.BlockSpec((LANE, LANE), lambda b, n: (0, 0)),
            pl.BlockSpec((1, LANE), lambda b, n: (0, 0)),
        ],
        out_specs=pl.BlockSpec((1, tn, LANE), lambda b, n: (b, n, 0)),
        compiler_params=pltpu.CompilerParams(
            dimension_semantics=("parallel", "parallel"),
            vmem_limit_bytes=_vmem_limit()),
    )(props, feat, w1, b1, w2, b2)


# --------------------------------------------------------------------------
# Parameter packing helpers (zero-pad to lane-dense 128 columns/rows).
# --------------------------------------------------------------------------
def _pad_row(b, n):
    return jnp.zeros((1, n), jnp.float32).at[0, :b.shape[0]].set(b)


def _prep_mlp(w1, b1, w2, b2):
    assert max(w1.shape[0], w1.shape[1], w2.shape[1]) <= LANE
    w1p = (jnp.zeros((LANE, LANE), jnp.float32)
           .at[:w1.shape[0], :w1.shape[1]].set(w1).astype(jnp.bfloat16))
    w2p = (jnp.zeros((LANE, LANE), jnp.float32)
           .at[:w2.shape[0], :w2.shape[1]].set(w2).astype(jnp.bfloat16))
    return (w1p, _pad_row(b1, LANE), w2p, _pad_row(b2, LANE))


def _prep_conv_w(w_hwio):
    kh, kw, cin, cout = w_hwio.shape
    wp = jnp.zeros((kh, kw, cin, LANE), jnp.float32).at[..., :cout].set(w_hwio)
    return wp.reshape(kh, kw * cin, LANE).astype(jnp.bfloat16)   # per-dy (dx,cin)-major


# --------------------------------------------------------------------------
# Glue: anchor grid, static bilinear weights, synthetic backbone.
# --------------------------------------------------------------------------
def anchor_points_np(h, w, space=SPACE):
    anchors = np.stack(np.meshgrid(np.arange(np.ceil(w / space)),
                                   np.arange(np.ceil(h / space))), -1) * space
    origin = np.array([w % space or space, h % space or space]) / 2
    return (anchors + origin).reshape(-1, 2).astype(np.float32)  # (N, 2) (x, y)


def _bilinear_weight_matrix_np(props, hf, wf, stride):
    """Static bilinear sampling weights (zeros padding, align_corners=False)."""
    props = np.asarray(props, np.float32)
    fx = props[:, 0] / np.float32(stride) - np.float32(0.5)
    fy = props[:, 1] / np.float32(stride) - np.float32(0.5)
    x0 = np.floor(fx)
    y0 = np.floor(fy)
    wx = fx - x0
    wy = fy - y0
    x0 = x0.astype(np.int64)
    y0 = y0.astype(np.int64)
    wm = np.zeros((props.shape[0], hf * wf), np.float32)
    rows = np.arange(props.shape[0])
    for dy in (0, 1):
        for dx in (0, 1):
            xi = x0 + dx
            yi = y0 + dy
            w = (wx if dx else 1 - wx) * (wy if dy else 1 - wy)
            valid = (xi >= 0) & (xi < wf) & (yi >= 0) & (yi < hf)
            idx = np.clip(yi * wf + xi, 0, hf * wf - 1)
            np.add.at(wm, (rows, idx), (w * valid).astype(np.float32))
    return wm


def synthetic_backbone(images_nhwc, proj_params):
    # The real backbone is injected into the PyTorch module; here: strided
    # average pooling + deterministic 1x1 projection to HIDDEN channels.
    feats = []
    for lvl, stride in enumerate(STRIDES):
        pooled = jax.lax.reduce_window(
            images_nhwc, 0.0, jax.lax.add,
            (1, stride, stride, 1), (1, stride, stride, 1), 'VALID')
        pooled = pooled / float(stride * stride)
        w, b = proj_params[lvl]
        feats.append(jnp.einsum('bhwc,cd->bhwd', pooled, w) + b)
    return feats, feats                                          # (feats, feats1)


# --------------------------------------------------------------------------
# Parameters (deterministic, in-script).
# --------------------------------------------------------------------------
def init_params(key):
    keys = jax.random.split(key, 10)

    def lin(k, fan_in, fan_out):
        kw, kb = jax.random.split(k)
        lim = 1.0 / np.sqrt(fan_in)
        return (jax.random.uniform(kw, (fan_in, fan_out), jnp.float32, -lim, lim),
                jax.random.uniform(kb, (fan_out,), jnp.float32, -lim, lim))

    # deform head
    w1d, b1d = lin(keys[0], HIDDEN, HIDDEN)
    w2d, b2d = lin(keys[1], HIDDEN, 2)
    # reg / cls heads fused: concat first layers, block-diagonal second layer
    w1r, b1r = lin(keys[2], HIDDEN, HIDDEN)
    w2r, b2r = lin(keys[3], HIDDEN, 2)
    w1c, b1c = lin(keys[4], HIDDEN, HIDDEN)
    w2c, b2c = lin(keys[5], HIDDEN, NUM_CLASSES + 1)
    w1f = jnp.concatenate([w1r, w1c], axis=1)
    b1f = jnp.concatenate([b1r, b1c])
    w2f = jnp.zeros((2 * HIDDEN, 2 + NUM_CLASSES + 1), jnp.float32)
    w2f = w2f.at[:HIDDEN, :2].set(w2r).at[HIDDEN:, 2:].set(w2c)
    b2f = jnp.concatenate([b2r, b2c])

    # pyramid fusion conv
    cin = HIDDEN * NUM_LEVELS
    lim = 1.0 / np.sqrt(cin * 9)
    kcw, kcb = jax.random.split(keys[6])
    conv_w = jax.random.uniform(kcw, (3, 3, cin, HIDDEN), jnp.float32, -lim, lim)
    conv_b = jax.random.uniform(kcb, (HIDDEN,), jnp.float32, -lim, lim)

    return {
        'deform': _prep_mlp(w1d, b1d, w2d, b2d),
        'heads': _prep_mlp(w1f, b1f, w2f, b2f),                  # reg+cls fused
        'conv_w': _prep_conv_w(conv_w),                          # (3, 3*cin, 128) bf16
        'conv_b': _pad_row(conv_b, LANE),                        # (1, 128) f32
        'conv_w_raw': conv_w, 'conv_b_raw': conv_b,              # for self-check
        'backbone': [lin(keys[7 + l], 3, HIDDEN) for l in range(NUM_LEVELS)],
    }


# --------------------------------------------------------------------------
# Full forward.
# --------------------------------------------------------------------------
def dpa_p2pnet_forward(images_nchw, params):
    B, _, Himg, Wimg = images_nchw.shape
    images = jnp.transpose(images_nchw, (0, 2, 3, 1))            # NCHW -> NHWC
    feats, _feats1 = synthetic_backbone(images, params['backbone'])

    anchors_np = anchor_points_np(Himg, Wimg, SPACE)             # static grid
    N = anchors_np.shape[0]
    proposals = jnp.broadcast_to(jnp.asarray(anchors_np)[None], (B, N, 2))

    # fuse the feature pyramid at stride-4 resolution; 3x3 conv in Pallas
    # TODO(synk): jax.image.resize 'bilinear' (half-pixel centers) may not
    # bit-match the reference F.interpolate align_corners setting.
    H0, W0 = feats[0].shape[1:3]
    ups = [feats[0]] + [jax.image.resize(f, (B, H0, W0, HIDDEN), 'bilinear')
                        for f in feats[1:]]
    fused_in = jnp.concatenate(ups, axis=-1).astype(jnp.bfloat16)
    fused = conv3x3(fused_in, params['conv_w'], params['conv_b'])  # (B, H0*W0, 128) bf16

    stride0 = STRIDES[0]
    # stage 1: anchors are a fixed grid -> precomputed interp matrix, fused with
    # the deform MLP in one Pallas kernel (no gather, no roi HBM round trip).
    wmat1 = _bilinear_weight_matrix_np(anchors_np, H0, W0, stride0)
    deltas = interp_mlp(wmat1, fused, params['deform'])[:, :N, :2]
    # TODO(synk): offset scaling (raw vs stride-scaled deltas) unverified against
    # the truncated reference forward.
    proposals2 = proposals + deltas

    # stage 2: refined proposals -> in-kernel bilinear sampling + fused reg/cls MLP
    head = sample_mlp(proposals2, fused, params['heads'], H0, W0, stride0)
    reg = head[:, :N, :2]
    logits = head[:, :N, 2:2 + NUM_CLASSES + 1]
    return {'pred_coords': proposals2 + reg, 'pred_logits': logits}


if __name__ == "__main__":
    key = jax.random.PRNGKey(0)
    kimg, kparam, kchk, kjit, kfeat = jax.random.split(key, 5)
    images = jax.random.normal(kimg, (2, 3, 32, 32), jnp.float32)   # NCHW, like PyTorch
    params = init_params(kparam)

    # self-check 1: row-tiled halo conv (tile_h=4 -> 2 row tiles/image) vs XLA conv
    xchk = jax.random.normal(kchk, (2, 8, 8, HIDDEN * NUM_LEVELS), jnp.float32)
    ref = jax.lax.conv_general_dilated(
        xchk, params['conv_w_raw'], (1, 1), 'SAME',
        dimension_numbers=('NHWC', 'HWIO', 'NHWC')) + params['conv_b_raw']
    got = conv3x3(xchk.astype(jnp.bfloat16), params['conv_w'], params['conv_b'],
                  tile_h=4)
    got = np.asarray(got.astype(jnp.float32))[:, :, :HIDDEN].reshape(ref.shape)
    np.testing.assert_allclose(got, np.asarray(ref), atol=5e-2, rtol=5e-2)

    # self-check 2: in-kernel bilinear construction == precomputed-matrix path
    anchors_np = anchor_points_np(32, 32)
    N = anchors_np.shape[0]
    props_np = anchors_np + np.asarray(
        jax.random.uniform(kjit, (N, 2), jnp.float32, -3.0, 3.0))
    feat_dbg = jax.random.normal(kfeat, (2, 64, 128), jnp.float32).astype(jnp.bfloat16)
    wm_dbg = _bilinear_weight_matrix_np(props_np, 8, 8, STRIDES[0])
    a = np.asarray(interp_mlp(wm_dbg, feat_dbg, params['deform']))
    b = np.asarray(sample_mlp(
        jnp.broadcast_to(jnp.asarray(props_np)[None], (2, N, 2)),
        feat_dbg, params['deform'], 8, 8, STRIDES[0]))
    np.testing.assert_allclose(a[:, :N], b[:, :N], atol=5e-2, rtol=5e-2)

    fwd = jax.jit(lambda im: dpa_p2pnet_forward(im, params))
    out = jax.block_until_ready(fwd(images))

    assert out['pred_coords'].shape == (2, 4, 2)
    assert out['pred_logits'].shape == (2, 4, NUM_CLASSES + 1)
    assert np.all(np.isfinite(np.asarray(out['pred_coords'])))
    assert np.all(np.isfinite(np.asarray(out['pred_logits'])))
    print("KERNEL_OK")
</pallas_src>

<mosaic_0001>
module attributes {stable_mosaic.version = 11 : i64} {
  func.func @_conv3x3_kernel(%arg0: i32, %arg1: i32, %arg2: memref<1x4x10x64xbf16, #tpu.memory_space<vmem>>, %arg3: memref<1x2x10x64xbf16, #tpu.memory_space<vmem>>, %arg4: memref<3x192x128xbf16, #tpu.memory_space<vmem>>, %arg5: memref<1x128xf32, #tpu.memory_space<vmem>>, %arg6: memref<1x32x128xbf16, #tpu.memory_space<vmem>>) attributes {dimension_semantics = [#tpu.dimension_semantics<parallel>, #tpu.dimension_semantics<parallel>], iteration_bounds = array<i64: 2, 2>, scalar_prefetch = 0 : i64, scratch_operands = 0 : i64, tpu.core_type = #tpu.core_type<tc>, window_params = [{transform_indices = @transform_0, window_bounds = array<i64: 1, 4, 10, 64>}, {transform_indices = @transform_1, window_bounds = array<i64: 1, 2, 10, 64>}, {pipeline_mode = #tpu.pipeline_mode<synchronous>, transform_indices = @transform_2, window_bounds = array<i64: 3, 192, 128>}, {pipeline_mode = #tpu.pipeline_mode<synchronous>, transform_indices = @transform_3, window_bounds = array<i64: 1, 128>}, {transform_indices = @transform_4, window_bounds = array<i64: 1, 32, 128>}]} {
    %c0 = arith.constant 0 : index
    %c0_0 = arith.constant 0 : index
    %c0_1 = arith.constant 0 : index
    %c0_2 = arith.constant 0 : index
    %0 = vector.load %arg2[%c0, %c0_0, %c0_1, %c0_2] : memref<1x4x10x64xbf16, #tpu.memory_space<vmem>>, vector<1x4x10x64xbf16>
    %1 = vector.shape_cast %0 : vector<1x4x10x64xbf16> to vector<4x10x64xbf16>
    %c0_3 = arith.constant 0 : index
    %c0_4 = arith.constant 0 : index
    %c0_5 = arith.constant 0 : index
    %c0_6 = arith.constant 0 : index
    %2 = vector.load %arg3[%c0_3, %c0_4, %c0_5, %c0_6] : memref<1x2x10x64xbf16, #tpu.memory_space<vmem>>, vector<1x2x10x64xbf16>
    %3 = vector.shape_cast %2 : vector<1x2x10x64xbf16> to vector<2x10x64xbf16>
    %4 = tpu.concatenate %1, %3 in 0 : vector<4x10x64xbf16>, vector<2x10x64xbf16> -> vector<6x10x64xbf16>
    %cst = arith.constant 0.000000e+00 : f32
    %5 = vector.broadcast %cst : f32 to vector<32x128xf32>
    %6 = vector.extract_strided_slice %4 {offsets = [0, 0, 0], sizes = [4, 8, 64], strides = [1, 1, 1]} : vector<6x10x64xbf16> to vector<4x8x64xbf16>
    %7 = vector.shape_cast %6 : vector<4x8x64xbf16> to vector<32x64xbf16>
    %8 = vector.extract_strided_slice %4 {offsets = [0, 1, 0], sizes = [4, 8, 64], strides = [1, 1, 1]} : vector<6x10x64xbf16> to vector<4x8x64xbf16>
    %9 = vector.shape_cast %8 : vector<4x8x64xbf16> to vector<32x64xbf16>
    %10 = vector.extract_strided_slice %4 {offsets = [0, 2, 0], sizes = [4, 8, 64], strides = [1, 1, 1]} : vector<6x10x64xbf16> to vector<4x8x64xbf16>
    %11 = vector.shape_cast %10 : vector<4x8x64xbf16> to vector<32x64xbf16>
    %12 = tpu.concatenate %7, %9, %11 in 1 : vector<32x64xbf16>, vector<32x64xbf16>, vector<32x64xbf16> -> vector<32x192xbf16>
    %c0_7 = arith.constant 0 : index
    %c0_8 = arith.constant 0 : index
    %c0_9 = arith.constant 0 : index
    %13 = vector.load %arg4[%c0_7, %c0_8, %c0_9] : memref<3x192x128xbf16, #tpu.memory_space<vmem>>, vector<1x192x128xbf16>
    %14 = vector.shape_cast %13 : vector<1x192x128xbf16> to vector<192x128xbf16>
    %cst_10 = arith.constant dense<0.000000e+00> : vector<32x128xf32>
    %15 = tpu.matmul %12, %14, %cst_10 {dimension_numbers = #tpu.dot_dimension_numbers<[1], [0], [0], [1], [0, 0, 1, 1], [], []>} : vector<32x192xbf16>, vector<192x128xbf16>, vector<32x128xf32> -> vector<32x128xf32>
    %16 = arith.addf %5, %15 : vector<32x128xf32>
    %17 = vector.extract_strided_slice %4 {offsets = [1, 0, 0], sizes = [4, 8, 64], strides = [1, 1, 1]} : vector<6x10x64xbf16> to vector<4x8x64xbf16>
    %18 = vector.shape_cast %17 : vector<4x8x64xbf16> to vector<32x64xbf16>
    %19 = vector.extract_strided_slice %4 {offsets = [1, 1, 0], sizes = [4, 8, 64], strides = [1, 1, 1]} : vector<6x10x64xbf16> to vector<4x8x64xbf16>
    %20 = vector.shape_cast %19 : vector<4x8x64xbf16> to vector<32x64xbf16>
    %21 = vector.extract_strided_slice %4 {offsets = [1, 2, 0], sizes = [4, 8, 64], strides = [1, 1, 1]} : vector<6x10x64xbf16> to vector<4x8x64xbf16>
    %22 = vector.shape_cast %21 : vector<4x8x64xbf16> to vector<32x64xbf16>
    %23 = tpu.concatenate %18, %20, %22 in 1 : vector<32x64xbf16>, vector<32x64xbf16>, vector<32x64xbf16> -> vector<32x192xbf16>
    %c1 = arith.constant 1 : index
    %c0_11 = arith.constant 0 : index
    %c0_12 = arith.constant 0 : index
    %24 = vector.load %arg4[%c1, %c0_11, %c0_12] : memref<3x192x128xbf16, #tpu.memory_space<vmem>>, vector<1x192x128xbf16>
    %25 = vector.shape_cast %24 : vector<1x192x128xbf16> to vector<192x128xbf16>
    %cst_13 = arith.constant dense<0.000000e+00> : vector<32x128xf32>
    %26 = tpu.matmul %23, %25, %cst_13 {dimension_numbers = #tpu.dot_dimension_numbers<[1], [0], [0], [1], [0, 0, 1, 1], [], []>} : vector<32x192xbf16>, vector<192x128xbf16>, vector<32x128xf32> -> vector<32x128xf32>
    %27 = arith.addf %16, %26 : vector<32x128xf32>
    %28 = vector.extract_strided_slice %4 {offsets = [2, 0, 0], sizes = [4, 8, 64], strides = [1, 1, 1]} : vector<6x10x64xbf16> to vector<4x8x64xbf16>
    %29 = vector.shape_cast %28 : vector<4x8x64xbf16> to vector<32x64xbf16>
    %30 = vector.extract_strided_slice %4 {offsets = [2, 1, 0], sizes = [4, 8, 64], strides = [1, 1, 1]} : vector<6x10x64xbf16> to vector<4x8x64xbf16>
    %31 = vector.shape_cast %30 : vector<4x8x64xbf16> to vector<32x64xbf16>
    %32 = vector.extract_strided_slice %4 {offsets = [2, 2, 0], sizes = [4, 8, 64], strides = [1, 1, 1]} : vector<6x10x64xbf16> to vector<4x8x64xbf16>
    %33 = vector.shape_cast %32 : vector<4x8x64xbf16> to vector<32x64xbf16>
    %34 = tpu.concatenate %29, %31, %33 in 1 : vector<32x64xbf16>, vector<32x64xbf16>, vector<32x64xbf16> -> vector<32x192xbf16>
    %c2 = arith.constant 2 : index
    %c0_14 = arith.constant 0 : index
    %c0_15 = arith.constant 0 : index
    %35 = vector.load %arg4[%c2, %c0_14, %c0_15] : memref<3x192x128xbf16, #tpu.memory_space<vmem>>, vector<1x192x128xbf16>
    %36 = vector.shape_cast %35 : vector<1x192x128xbf16> to vector<192x128xbf16>
    %cst_16 = arith.constant dense<0.000000e+00> : vector<32x128xf32>
    %37 = tpu.matmul %34, %36, %cst_16 {dimension_numbers = #tpu.dot_dimension_numbers<[1], [0], [0], [1], [0, 0, 1, 1], [], []>} : vector<32x192xbf16>, vector<192x128xbf16>, vector<32x128xf32> -> vector<32x128xf32>
    %38 = arith.addf %27, %37 : vector<32x128xf32>
    %c0_17 = arith.constant 0 : index
    %c0_18 = arith.constant 0 : index
    %39 = vector.load %arg5[%c0_17, %c0_18] : memref<1x128xf32, #tpu.memory_space<vmem>>, vector<1x128xf32>
    %40 = vector.broadcast %39 : vector<1x128xf32> to vector<32x128xf32>
    %41 = arith.addf %38, %40 : vector<32x128xf32>
    %42 = arith.truncf %41 : vector<32x128xf32> to vector<32x128xbf16>
    %c0_19 = arith.constant 0 : index
    %c0_20 = arith.constant 0 : index
    %c0_21 = arith.constant 0 : index
    %43 = vector.load %arg6[%c0_19, %c0_20, %c0_21] : memref<1x32x128xbf16, #tpu.memory_space<vmem>>, vector<1x32x128xbf16>
    %44 = vector.shape_cast %43 : vector<1x32x128xbf16> to vector<32x128xbf16>
    %45 = vector.shape_cast %42 : vector<32x128xbf16> to vector<1x32x128xbf16>
    tpu.vector_store %arg6[%c0_19, %c0_20, %c0_21], %45 {strides = array<i32>} : memref<1x32x128xbf16, #tpu.memory_space<vmem>>, vector<1x32x128xbf16>,
    return
  }
  func.func @transform_0(%arg0: i32, %arg1: i32) -> (i32, i32, i32, i32) {
    %c0_i32 = arith.constant 0 : i32
    %c0_i32_0 = arith.constant 0 : i32
    %c0_i32_1 = arith.constant 0 : i32
    return %arg0, %arg1, %c0_i32, %c0_i32_0 : i32, i32, i32, i32
  }
  func.func @transform_1(%arg0: i32, %arg1: i32) -> (i32, i32, i32, i32) {
    %c1_i32 = arith.constant 1 : i32
    %0 = arith.addi %arg1, %c1_i32 : i32
    %c2_i32 = arith.constant 2 : i32
    %1 = arith.muli %0, %c2_i32 : i32
    %c0_i32 = arith.constant 0 : i32
    %c0_i32_0 = arith.constant 0 : i32
    %c0_i32_1 = arith.constant 0 : i32
    return %arg0, %1, %c0_i32, %c0_i32_0 : i32, i32, i32, i32
  }
  func.func @transform_2(%arg0: i32, %arg1: i32) -> (i32, i32, i32) {
    %c0_i32 = arith.constant 0 : i32
    %c0_i32_0 = arith.constant 0 : i32
    %c0_i32_1 = arith.constant 0 : i32
    %c0_i32_2 = arith.constant 0 : i32
    return %c0_i32, %c0_i32_0, %c0_i32_1 : i32, i32, i32
  }
  func.func @transform_3(%arg0: i32, %arg1: i32) -> (i32, i32) {
    %c0_i32 = arith.constant 0 : i32
    %c0_i32_0 = arith.constant 0 : i32
    %c0_i32_1 = arith.constant 0 : i32
    return %c0_i32, %c0_i32_0 : i32, i32
  }
  func.func @transform_4(%arg0: i32, %arg1: i32) -> (i32, i32, i32) {
    %c0_i32 = arith.constant 0 : i32
    %c0_i32_0 = arith.constant 0 : i32
    return %arg0, %arg1, %c0_i32 : i32, i32, i32
  }
}

</mosaic_0001>

<llo_original>
// kernel: tpu_custom_call.1
$region0: #{tpu_custom_call.1}
  #allocation0 [shape = 'u32[]', space=smem, size = 0x4, offset = 0x4, fixed_abs, tag = 'smem constant byte address 0x4 - core index']
  #allocation1 [shape = 'u32[72,128]{1,0:T(1,128)}', space=vmem, size = 0x9000, scoped, tag = 'internal scratch']
  %s0 = inlined_call_operand.vmem [shape: bf16[2,10,10,64], index: 0, kind: input, shape index: {}]
  %s1 = inlined_call_operand.vmem [shape: bf16[2,10,10,64], index: 1, kind: input, shape index: {}]
  %s2 = inlined_call_operand.vmem [shape: bf16[3,192,128], index: 2, kind: input, shape index: {}]
  %s3 = inlined_call_operand.vmem [shape: f32[1,128], index: 3, kind: input, shape index: {}]
  %s4 = inlined_call_operand.hbm [shape: bf16[2,64,128], index: 4, kind: output, shape index: {}]
  %s5 = sld [smem:[#allocation0]]
  $region49: #{tpu_custom_call.1} parent=0
    _
  %s7 = ssub.s32 1, %s5
  %s8 = scalar_select 0, %s7, %s5
  $region1: #{tpu_custom_call.1} parent=0
    #allocation2 [shape = 'u8[16384]{0}', space=vmem, size = 0x4000, scoped, tag = 'output window, operand 0']
    #allocation3 [shape = 's32[2]{0}', space=sflag, size = 0x8, scoped, tag = 'scoped memory for tpu_custom_call.1']
    %9 = vsyncpa [#allocation3], 0
    %s10 = scalar_lea.sflag [#allocation3], 1
    %11 = vsyncpa %s10, 0
    loop: start=0, step=1, limit=6
    $region2: #{tpu_custom_call.1} parent=1 // loop_pre_header
      _
    $region3: #{tpu_custom_call.1} parent=1 // loop_header
      %s13 = sphi 0, %s17
      %p14 = scmp.ge.s32.totalorder %s13, 6
      %s20 = sphi 0, %s32
      %s21 = sphi 0, %s28
      %s22 = sphi 0, %s20
      %s23 = sphi 0, %s21
      %s24 = sphi 0, %s22
      %s25 = sphi 0, %s23
      %s37 = sphi 0, %s39
      %s40 = sphi 0, %s37
      %s41 = sphi 0, %s40
      %s57 = sphi 0, %s41
      %s69 = sphi 0, %s71
      %s72 = sphi 0, %s69
      %s73 = sphi 0, %s72
      %s89 = sphi 0, %s73
      %s93 = sphi 0, %s93
      %s95 = sphi 0, %s93
      %s96 = sphi 0, %s95
      %s110 = sphi 0, %s96
      %s114 = sphi 0, %s114
      %s116 = sphi 0, %s114
      %s117 = sphi 0, %s116
      %s131 = sphi 0, %s117
      %s139 = sphi 0, %s141
      %s142 = sphi 0, %s139
      %s143 = sphi 0, %s142
      %s159 = sphi 0, %s143
    $region4: #{tpu_custom_call.1} parent=1 // loop_header_branch
      %16 = sbr.rel (%p14) target = $region8
    $region5: #{tpu_custom_call.1} parent=1 // loop_body
      %s18 = ssub.s32 %s13, 1
      %s19 = ssub.s32 %s13, 2
      %s26 = sadd.s32 1, %s21
      %p27 = scmp.ge.s32.totalorder %s26, 2
      %s28 = scalar_select %p27, 0, %s26
      %s29 = sadd.s32 1, %s20
      %s30 = scalar_select %p27, %s29, %s20
      %p31 = scmp.ge.s32.totalorder %s30, 2
      %s32 = scalar_select %p31, 0, %s30
      %s33 = ssub.s32 %s20, %s32
      %s34 = ssub.s32 %s21, %s28
      %s35 = sor.u32 %s33, %s34
      %p36 = scmp.eq.s32.totalorder %s35, 0
      %s38 = sadd.s32 %s37, 1
      %s39 = scalar_select %p36, %s37, %s38
      %p42 = pneg %p36
      %p43 = scmp.eq.s32.totalorder %s13, 3
      %p44 = por %p42, %p43
      %p45 = scmp.ne.s32.totalorder %s37, %s40
      %p46 = scmp.eq.s32.totalorder %s13, 0
      %p47 = por %p45, %p46
      %p48 = scmp.ne.s32.totalorder %s37, %s40
      %p49 = scmp.eq.s32.totalorder %s18, 3
      %p50 = por %p48, %p49
      %p51 = scmp.ne.s32.totalorder %s40, %s41
      %p52 = scmp.eq.s32.totalorder %s18, 0
      %p53 = por %p51, %p52
      %p54 = scmp.ne.s32.totalorder %s40, %s41
      %p55 = scmp.eq.s32.totalorder %s19, 3
      %p56 = por %p54, %p55
      %p58 = scmp.ne.s32.totalorder %s41, %s57
      %p59 = scmp.eq.s32.totalorder %s19, 0
      %p60 = por %p58, %p59
      %s61 = sadd.s32 %s21, 1
      %s62 = smul.u32 %s61, 2
      %s63 = sadd.s32 %s28, 1
      %s64 = smul.u32 %s63, 2
      %s65 = ssub.s32 %s20, %s32
      %s66 = ssub.s32 %s62, %s64
      %s67 = sor.u32 %s65, %s66
      %p68 = scmp.eq.s32.totalorder %s67, 0
      %s70 = sadd.s32 %s69, 1
      %s71 = scalar_select %p68, %s69, %s70
      %p74 = pneg %p68
      %p75 = scmp.eq.s32.totalorder %s13, 3
      %p76 = por %p74, %p75
      %p77 = scmp.ne.s32.totalorder %s69, %s72
      %p78 = scmp.eq.s32.totalorder %s13, 0
      %p79 = por %p77, %p78
      %p80 = scmp.ne.s32.totalorder %s69, %s72
      %p81 = scmp.eq.s32.totalorder %s18, 3
      %p82 = por %p80, %p81
      %p83 = scmp.ne.s32.totalorder %s72, %s73
      %p84 = scmp.eq.s32.totalorder %s18, 0
      %p85 = por %p83, %p84
      %p86 = scmp.ne.s32.totalorder %s72, %s73
      %p87 = scmp.eq.s32.totalorder %s19, 3
      %p88 = por %p86, %p87
      %p90 = scmp.ne.s32.totalorder %s73, %s89
      %p91 = scmp.eq.s32.totalorder %s19, 0
      %p92 = por %p90, %p91
      %s94 = sadd.s32 %s93, 1
      %p97 = scmp.eq.s32.totalorder %s13, 3
      %p98 = scmp.ne.s32.totalorder %s93, %s95
      %p99 = scmp.eq.s32.totalorder %s13, 0
      %p100 = por %p98, %p99
      %p101 = scmp.ne.s32.totalorder %s93, %s95
      %p102 = scmp.eq.s32.totalorder %s18, 3
      %p103 = por %p101, %p102
      %p104 = scmp.ne.s32.totalorder %s95, %s96
      %p105 = scmp.eq.s32.totalorder %s18, 0
      %p106 = por %p104, %p105
      %p107 = scmp.ne.s32.totalorder %s95, %s96
      %p108 = scmp.eq.s32.totalorder %s19, 3
      %p109 = por %p107, %p108
      %p111 = scmp.ne.s32.totalorder %s96, %s110
      %p112 = scmp.eq.s32.totalorder %s19, 0
      %p113 = por %p111, %p112
      %s115 = sadd.s32 %s114, 1
      %p118 = scmp.eq.s32.totalorder %s13, 3
      %p119 = scmp.ne.s32.totalorder %s114, %s116
      %p120 = scmp.eq.s32.totalorder %s13, 0
      %p121 = por %p119, %p120
      %p122 = scmp.ne.s32.totalorder %s114, %s116
      %p123 = scmp.eq.s32.totalorder %s18, 3
      %p124 = por %p122, %p123
      %p125 = scmp.ne.s32.totalorder %s116, %s117
      %p126 = scmp.eq.s32.totalorder %s18, 0
      %p127 = por %p125, %p126
      %p128 = scmp.ne.s32.totalorder %s116, %s117
      %p129 = scmp.eq.s32.totalorder %s19, 3
      %p130 = por %p128, %p129
      %p132 = scmp.ne.s32.totalorder %s117, %s131
      %p133 = scmp.eq.s32.totalorder %s19, 0
      %p134 = por %p132, %p133
      %s135 = ssub.s32 %s20, %s32
      %s136 = ssub.s32 %s21, %s28
      %s137 = sor.u32 %s135, %s136
      %p138 = scmp.eq.s32.totalorder %s137, 0
      %s140 = sadd.s32 %s139, 1
      %s141 = scalar_select %p138, %s139, %s140
      %p144 = pneg %p138
      %p145 = scmp.eq.s32.totalorder %s13, 3
      %p146 = por %p144, %p145
      %p147 = scmp.ne.s32.totalorder %s139, %s142
      %p148 = scmp.eq.s32.totalorder %s13, 0
      %p149 = por %p147, %p148
      %p150 = scmp.ne.s32.totalorder %s139, %s142
      %p151 = scmp.eq.s32.totalorder %s18, 3
      %p152 = por %p150, %p151
      %p153 = scmp.ne.s32.totalorder %s142, %s143
      %p154 = scmp.eq.s32.totalorder %s18, 0
      %p155 = por %p153, %p154
      %p156 = scmp.ne.s32.totalorder %s142, %s143
      %p157 = scmp.eq.s32.totalorder %s19, 3
      %p158 = por %p156, %p157
      %p160 = scmp.ne.s32.totalorder %s143, %s159
      %p161 = scmp.eq.s32.totalorder %s19, 0
      %p162 = por %p160, %p161
      %p163 = scmp.le.s32.totalorder 1, %s13
      %p164 = scmp.lt.s32.totalorder %s13, 5
      %p165 = pnand %p163, %p164
      %p166 = pneg %p165
      // Predicated region
      $region9: #{tpu_custom_call.1} parent=5 // pred_check
        _
      $region10: #{tpu_custom_call.1} parent=5 // pred_check_branch
        %168 = sbr.rel (%p165) target = $region12
      $region11: #{tpu_custom_call.1} parent=5 // pred_region
        %s169 = ssub.s32 %s13, 1
        // Predicated region
        $region13: #{tpu_custom_call.1} parent=11 // pred_check
          %p170 = pneg %p106
        $region14: #{tpu_custom_call.1} parent=11 // pred_check_branch
          %172 = sbr.rel (%p170) target = $region16
        $region15: #{tpu_custom_call.1} parent=11 // pred_region
          _
        $region16: #{tpu_custom_call.1} parent=11 // pred_fallthru
          _
        // Predicated region
        $region17: #{tpu_custom_call.1} parent=11 // pred_check
          %p173 = pneg %p127
        $region18: #{tpu_custom_call.1} parent=11 // pred_check_branch
          %175 = sbr.rel (%p173) target = $region20
        $region19: #{tpu_custom_call.1} parent=11 // pred_region
          _
        $region20: #{tpu_custom_call.1} parent=11 // pred_fallthru
          _
      $region12: #{tpu_custom_call.1} parent=5 // pred_fallthru
        _
      %p176 = scmp.lt.s32.totalorder %s13, 4
      // Predicated region
      $region21: #{tpu_custom_call.1} parent=5 // pred_check
        %p177 = pneg %p176
      $region22: #{tpu_custom_call.1} parent=5 // pred_check_branch
        %179 = sbr.rel (%p177) target = $region24
      $region23: #{tpu_custom_call.1} parent=5 // pred_region
        // Predicated region
        $region25: #{tpu_custom_call.1} parent=23 // pred_check
          %p180 = pneg %p47
        $region26: #{tpu_custom_call.1} parent=23 // pred_check_branch
          %182 = sbr.rel (%p180) target = $region28
        $region27: #{tpu_custom_call.1} parent=23 // pred_region
          %s183 = smul.u32 4, %s21
          %s184 = ssub.s32 10, %s183
          %p185 = scmp.lt.s32.totalorder %s184, 4
          %s186 = scalar_select %p185, %s184, 4
          %s187 = smul.u32 4, %s186
          %s188 = smul.u32 %s187, 2
          %p189 = scmp.lt.s32.totalorder %s20, 1
          %s190 = scalar_select %p189, %s20, 1
          %p191 = scmp.lt.s32.totalorder %s183, 9
          %s192 = scalar_select %p191, %s183, 9
          %s193 = smul.addr %s192, 2
          %s194 = smul.addr %s190, 20
          %s195 = sadd.s32 %s193, %s194
          %s196 = smul.addr %s195, 4
          %s197 = scalar_lea.vmem %s0, %s196
          %s198 = smul.u32 4, %s21
          %s199 = ssub.s32 10, %s198
          %p200 = scmp.lt.s32.totalorder %s199, 4
          %s201 = scalar_select %p200, %s199, 4
          %s202 = smul.u32 4, %s201
          %s203 = smul.u32 %s202, 2
        $region28: #{tpu_custom_call.1} parent=23 // pred_fallthru
          _
        // Predicated region
        $region29: #{tpu_custom_call.1} parent=23 // pred_check
          %p204 = pneg %p79
        $region30: #{tpu_custom_call.1} parent=23 // pred_check_branch
          %206 = sbr.rel (%p204) target = $region32
        $region31: #{tpu_custom_call.1} parent=23 // pred_region
          %s207 = sadd.s32 %s21, 1
          %s208 = smul.u32 %s207, 2
          %s209 = smul.u32 2, %s208
          %p210 = scmp.lt.s32.totalorder %s20, 1
          %s211 = scalar_select %p210, %s20, 1
          %p212 = scmp.lt.s32.totalorder %s209, 9
          %s213 = scalar_select %p212, %s209, 9
          %s214 = smul.addr %s213, 2
          %s215 = smul.addr %s211, 20
          %s216 = sadd.s32 %s214, %s215
          %s217 = smul.addr %s216, 4
          %s218 = scalar_lea.vmem %s1, %s217
          %s219 = sadd.s32 %s21, 1
          %s220 = smul.u32 %s219, 2
          %s221 = smul.u32 2, %s220
        $region32: #{tpu_custom_call.1} parent=23 // pred_fallthru
          _
      $region24: #{tpu_custom_call.1} parent=5 // pred_fallthru
        _
      %p222 = scmp.le.s32.totalorder 1, %s13
      %p223 = scmp.lt.s32.totalorder %s13, 5
      %p224 = pnand %p222, %p223
      %p225 = pneg %p224
      // Predicated region
      $region33: #{tpu_custom_call.1} parent=5 // pred_check
        _
      $region34: #{tpu_custom_call.1} parent=5 // pred_check_branch
        %227 = sbr.rel (%p224) target = $region36
      $region35: #{tpu_custom_call.1} parent=5 // pred_region
        %s228 = ssub.s32 %s13, 1
        %s229 = smul.u32 4, %s23
        %s230 = ssub.s32 10, %s229
        %p231 = scmp.lt.s32.totalorder %s230, 4
        %s232 = scalar_select %p231, %s230, 4
        %s233 = smul.u32 4, %s232
        %s234 = smul.u32 %s233, 2
        %p235 = scmp.lt.s32.totalorder %s22, 1
        %s236 = scalar_select %p235, %s22, 1
        %p237 = scmp.lt.s32.totalorder %s229, 9
        %s238 = scalar_select %p237, %s229, 9
        %s239 = smul.addr %s238, 2
        %s240 = smul.addr %s236, 20
        %s241 = sadd.s32 %s239, %s240
        %s242 = smul.addr %s241, 4
        %s243 = scalar_lea.vmem %s0, %s242
        %p244 = pneg %p53
        %p245 = pneg %p50
        %s246 = sadd.s32 %s23, 1
        %s247 = smul.u32 %s246, 2
        %s248 = smul.u32 2, %s247
        %p249 = scmp.lt.s32.totalorder %s22, 1
        %s250 = scalar_select %p249, %s22, 1
        %p251 = scmp.lt.s32.totalorder %s248, 9
        %s252 = scalar_select %p251, %s248, 9
        %s253 = smul.addr %s252, 2
        %s254 = smul.addr %s250, 20
        %s255 = sadd.s32 %s253, %s254
        %s256 = smul.addr %s255, 4
        %s257 = scalar_lea.vmem %s1, %s256
        %p258 = pneg %p85
        %p259 = pneg %p82
        %p260 = pneg %p106
        %p261 = pneg %p103
        %p262 = pneg %p127
        %p263 = pneg %p124
        %p264 = pneg %p155
        %p265 = pneg %p152
        %s266 = sand.u32 %s142, 1
        %s267 = scalar_lea.sflag [#allocation3], %s266
        %s268 = sand.u32 %s142, 1
        %s269 = smul.addr %s268, 16
        %s270 = scalar_lea.vmem [#allocation2], %s269
        %s271 = smul.u32 4, %s23
        %s272 = ssub.s32 10, %s271
        %p273 = scmp.lt.s32.totalorder %s272, 4
        %s274 = scalar_select %p273, %s272, 4
        %s275 = smul.u32 4, %s274
        %s276 = smul.u32 %s275, 2
        %p277 = scmp.lt.s32.totalorder %s22, 1
        %s278 = scalar_select %p277, %s22, 1
        %p279 = scmp.lt.s32.totalorder %s271, 9
        %s280 = scalar_select %p279, %s271, 9
        %s281 = smul.addr %s280, 2
        %s282 = smul.addr %s278, 20
        %s283 = sadd.s32 %s281, %s282
        %s284 = smul.addr %s283, 4
        %s285 = scalar_lea.vmem %s0, %s284
        %s286 = smul.u32 4, %s23
        %s287 = ssub.s32 10, %s286
        %p288 = scmp.lt.s32.totalorder %s287, 4
        %s289 = scalar_select %p288, %s287, 4
        %s290 = smul.u32 4, %s289
        %s291 = smul.u32 %s290, 2
        %s292 = sadd.s32 %s23, 1
        %s293 = smul.u32 %s292, 2
        %s294 = smul.u32 2, %s293
        %p295 = scmp.lt.s32.totalorder %s22, 1
        %s296 = scalar_select %p295, %s22, 1
        %p297 = scmp.lt.s32.totalorder %s294, 9
        %s298 = scalar_select %p297, %s294, 9
        %s299 = smul.addr %s298, 2
        %s300 = smul.addr %s296, 20
        %s301 = sadd.s32 %s299, %s300
        %s302 = smul.addr %s301, 4
        %s303 = scalar_lea.vmem %s1, %s302
        %s304 = sadd.s32 %s23, 1
        %s305 = smul.u32 %s304, 2
        %s306 = smul.u32 2, %s305
        %s307 = smul.u32 4, %s23
        %v309 = vld [vmem:[%s285] sm:$0xf]
        %v310 = vld [vmem:[%s285 + $0x4] sm:$0x1]
        %v311 = vld [vmem:[%s285 + $0x8] sm:$0xf]
        %v312 = vld [vmem:[%s285 + $0xc] sm:$0x1]
        %v313 = vld [vmem:[%s285 + $0x10] sm:$0xf]
        %v314 = vld [vmem:[%s285 + $0x14] sm:$0x1]
        %v315 = vld [vmem:[%s285 + $0x18] sm:$0xf]
        %v316 = vld [vmem:[%s285 + $0x1c] sm:$0x1]
        %v317 = vld [vmem:[%s303] sm:$0xf]
        %v318 = vld [vmem:[%s303 + $0x4] sm:$0x1]
        %v319 = vld [vmem:[%s303 + $0x8] sm:$0xf]
        %v320 = vld [vmem:[%s303 + $0xc] sm:$0x1]
        %vm321 = vsmask.f32 3328
        %vm322 = vsmask.f32 7440
        %vm323 = vmor %vm321, %vm322
        %v325 = vshrl.u32 %v309, 16
        %v327 = vrot.slane %v325, 4
        %v328 = vshll.u32 %v309, 16
        %v330 = vrot.slane %v328, 5
        %v331 = vor.u32 %v327, %v330
        %v332 = vrot.slane %v331, 4
        %v334 = vshll.u32 %v310, 16
        %v336 = vrot.slane %v334, 5
        %v337 = vsel %vm323, %v332, %v336
        %v339 = vshrl.u32 %v311, 16
        %v341 = vrot.slane %v339, 4
        %v342 = vshll.u32 %v311, 16
        %v344 = vrot.slane %v342, 5
        %v345 = vor.u32 %v341, %v344
        %v346 = vrot.slane %v345, 4
        %v348 = vshll.u32 %v312, 16
        %v350 = vrot.slane %v348, 5
        %v351 = vsel %vm323, %v346, %v350
        %v353 = vshrl.u32 %v313, 16
        %v355 = vrot.slane %v353, 4
        %v356 = vshll.u32 %v313, 16
        %v358 = vrot.slane %v356, 5
        %v359 = vor.u32 %v355, %v358
        %v360 = vrot.slane %v359, 4
        %v362 = vshll.u32 %v314, 16
        %v364 = vrot.slane %v362, 5
        %v365 = vsel %vm323, %v360, %v364
        %v367 = vshrl.u32 %v315, 16
        %v369 = vrot.slane %v367, 4
        %v370 = vshll.u32 %v315, 16
        %v372 = vrot.slane %v370, 5
        %v373 = vor.u32 %v369, %v372
        %v374 = vrot.slane %v373, 4
        %v376 = vshll.u32 %v316, 16
        %v378 = vrot.slane %v376, 5
        %v379 = vsel %vm323, %v374, %v378
        %vm388 = vcmask 1042432
        %vm389 = vcmask 1046532
        %vm390 = vmor %vm388, %vm389
        %v391 = vrot.slane %v309, 5
        %v392 = vrot.slane %v391, 4
        %v393 = vrot.slane %v310, 5
        %v394 = vsel %vm390, %v392, %v393
        %v395 = vrot.slane %v311, 5
        %v396 = vrot.slane %v395, 4
        %v397 = vrot.slane %v312, 5
        %v398 = vsel %vm390, %v396, %v397
        %v399 = vrot.slane %v313, 5
        %v400 = vrot.slane %v399, 4
        %v401 = vrot.slane %v314, 5
        %v402 = vsel %vm390, %v400, %v401
        %v403 = vrot.slane %v315, 5
        %v404 = vrot.slane %v403, 4
        %v405 = vrot.slane %v316, 5
        %v406 = vsel %vm390, %v404, %v405
        %v407 = vunpack.c.l.b16 %v309
        %v408 = vunpack.c.l.b16 %v311
        %v409 = vunpack.c.l.b16 %v313
        %v410 = vunpack.c.l.b16 %v315
        %v411 = vpack.c.b16 %v408, %v407
        %v412 = vpack.c.b16 %v410, %v409
        %v413 = vunpack.c.l.b16 %v337
        %v414 = vunpack.c.l.b16 %v351
        %v415 = vunpack.c.l.b16 %v365
        %v416 = vunpack.c.l.b16 %v379
        %v417 = vpack.c.b16 %v414, %v413
        %v418 = vpack.c.b16 %v416, %v415
        %419 = vrot.lane.b32.xlu0 %v417, 64
        %v420 = vpop.permute.xlu0 %419
        %421 = vrot.lane.b32.xlu0 %v418, 64
        %v422 = vpop.permute.xlu0 %421
        %v423 = vunpack.c.l.b16 %v394
        %v424 = vunpack.c.l.b16 %v398
        %v425 = vunpack.c.l.b16 %v402
        %v426 = vunpack.c.l.b16 %v406
        %v427 = vpack.c.b16 %v424, %v423
        %v428 = vpack.c.b16 %v426, %v425
        %vm429 = vcmask 523264
        %v432 = vsel %vm429, %v411, %v420
        %v436 = vsel %vm429, %v412, %v422
        %v438 = vld [vmem:[%s2] sm:$0xf]
        %v439 = vld [vmem:[%s2 + $0x4] sm:$0xf]
        %v440 = vld [vmem:[%s2 + $0x8] sm:$0xf]
        %v441 = vld [vmem:[%s2 + $0xc] sm:$0xf]
        %v442 = vld [vmem:[%s2 + $0x10] sm:$0xf]
        %v443 = vld [vmem:[%s2 + $0x14] sm:$0xf]
        %v444 = vld [vmem:[%s2 + $0x18] sm:$0xf]
        %v445 = vld [vmem:[%s2 + $0x1c] sm:$0xf]
        %v446 = vld [vmem:[%s2 + $0x20] sm:$0xf]
        %v447 = vld [vmem:[%s2 + $0x24] sm:$0xf]
        %v448 = vld [vmem:[%s2 + $0x28] sm:$0xf]
        %v449 = vld [vmem:[%s2 + $0x2c] sm:$0xf]
        %v450 = vld [vmem:[%s2 + $0x30] sm:$0xf]
        %v451 = vld [vmem:[%s2 + $0x34] sm:$0xf]
        %v452 = vld [vmem:[%s2 + $0x38] sm:$0xf]
        %v453 = vld [vmem:[%s2 + $0x3c] sm:$0xf]
        %v454 = vld [vmem:[%s2 + $0x40] sm:$0xf]
        %v455 = vld [vmem:[%s2 + $0x44] sm:$0xf]
        %v456 = vld [vmem:[%s2 + $0x48] sm:$0xf]
        %v457 = vld [vmem:[%s2 + $0x4c] sm:$0xf]
        %v458 = vld [vmem:[%s2 + $0x50] sm:$0xf]
        %v459 = vld [vmem:[%s2 + $0x54] sm:$0xf]
        %v460 = vld [vmem:[%s2 + $0x58] sm:$0xf]
        %v461 = vld [vmem:[%s2 + $0x5c] sm:$0xf]
        %v463 = vshrl.u32 %v317, 16
        %v465 = vrot.slane %v463, 4
        %v466 = vshll.u32 %v317, 16
        %v468 = vrot.slane %v466, 5
        %v469 = vor.u32 %v465, %v468
        %v470 = vrot.slane %v469, 4
        %v472 = vshll.u32 %v318, 16
        %v474 = vrot.slane %v472, 5
        %v475 = vsel %vm323, %v470, %v474
        %v478 = vrot.slane %v317, 5
        %v479 = vrot.slane %v478, 4
        %v480 = vrot.slane %v318, 5
        %v481 = vsel %vm390, %v479, %v480
        %v482 = vunpack.c.l.b16 %v317
        %v483 = vpack.c.b16 %v409, %v408
        %v484 = vpack.c.b16 %v482, %v410
        %v485 = vunpack.c.l.b16 %v475
        %v486 = vpack.c.b16 %v415, %v414
        %v487 = vpack.c.b16 %v485, %v416
        %488 = vrot.lane.b32.xlu0 %v486, 64
        %v489 = vpop.permute.xlu0 %488
        %490 = vrot.lane.b32.xlu0 %v487, 64
        %v491 = vpop.permute.xlu0 %490
        %v492 = vunpack.c.l.b16 %v481
        %v493 = vpack.c.b16 %v425, %v424
        %v494 = vpack.c.b16 %v492, %v426
        %v497 = vsel %vm429, %v483, %v489
        %v501 = vsel %vm429, %v484, %v491
        %s503 = scalar_lea.vmem %s2, 96
        %v504 = vld [vmem:[%s503] sm:$0xf]
        %v505 = vld [vmem:[%s503 + $0x4] sm:$0xf]
        %v506 = vld [vmem:[%s503 + $0x8] sm:$0xf]
        %v507 = vld [vmem:[%s503 + $0xc] sm:$0xf]
        %v508 = vld [vmem:[%s503 + $0x10] sm:$0xf]
        %v509 = vld [vmem:[%s503 + $0x14] sm:$0xf]
        %v510 = vld [vmem:[%s503 + $0x18] sm:$0xf]
        %v511 = vld [vmem:[%s503 + $0x1c] sm:$0xf]
        %v512 = vld [vmem:[%s503 + $0x20] sm:$0xf]
        %v513 = vld [vmem:[%s503 + $0x24] sm:$0xf]
        %v514 = vld [vmem:[%s503 + $0x28] sm:$0xf]
        %v515 = vld [vmem:[%s503 + $0x2c] sm:$0xf]
        %v516 = vld [vmem:[%s503 + $0x30] sm:$0xf]
        %v517 = vld [vmem:[%s503 + $0x34] sm:$0xf]
        %v518 = vld [vmem:[%s503 + $0x38] sm:$0xf]
        %v519 = vld [vmem:[%s503 + $0x3c] sm:$0xf]
        %v520 = vld [vmem:[%s503 + $0x40] sm:$0xf]
        %v521 = vld [vmem:[%s503 + $0x44] sm:$0xf]
        %v522 = vld [vmem:[%s503 + $0x48] sm:$0xf]
        %v523 = vld [vmem:[%s503 + $0x4c] sm:$0xf]
        %v524 = vld [vmem:[%s503 + $0x50] sm:$0xf]
        %v525 = vld [vmem:[%s503 + $0x54] sm:$0xf]
        %v526 = vld [vmem:[%s503 + $0x58] sm:$0xf]
        %v527 = vld [vmem:[%s503 + $0x5c] sm:$0xf]
        %v552 = vunpack.c.l.b16 %v504
        %v553 = vunpack.c.l.b16 %v505
        %v554 = vunpack.c.l.b16 %v506
        %v555 = vunpack.c.l.b16 %v507
        %v556 = vunpack.c.l.b16 %v508
        %v557 = vunpack.c.l.b16 %v509
        %v558 = vunpack.c.l.b16 %v510
        %v559 = vunpack.c.l.b16 %v511
        %v560 = vunpack.c.l.b16 %v512
        %v561 = vunpack.c.l.b16 %v513
        %v562 = vunpack.c.l.b16 %v514
        %v563 = vunpack.c.l.b16 %v515
        %v564 = vunpack.c.l.b16 %v516
        %v565 = vunpack.c.l.b16 %v517
        %v566 = vunpack.c.l.b16 %v518
        %v567 = vunpack.c.l.b16 %v519
        %v568 = vunpack.c.l.b16 %v520
        %v569 = vunpack.c.l.b16 %v521
        %v570 = vunpack.c.l.b16 %v522
        %v571 = vunpack.c.l.b16 %v523
        %v572 = vunpack.c.l.b16 %v524
        %v573 = vunpack.c.l.b16 %v525
        %v574 = vunpack.c.l.b16 %v526
        %v575 = vunpack.c.l.b16 %v527
        %v576 = vpack.c.b16 %v553, %v552
        %v577 = vpack.c.b16 %v555, %v554
        %v578 = vpack.c.b16 %v557, %v556
        %v579 = vpack.c.b16 %v559, %v558
        %v580 = vpack.c.b16 %v561, %v560
        %v581 = vpack.c.b16 %v563, %v562
        %v582 = vpack.c.b16 %v565, %v564
        %v583 = vpack.c.b16 %v567, %v566
        %v584 = vpack.c.b16 %v569, %v568
        %v585 = vpack.c.b16 %v571, %v570
        %v586 = vpack.c.b16 %v573, %v572
        %v587 = vpack.c.b16 %v575, %v574
        %v601 = vsel %vm429, %v493, 0
        %v604 = vsel %vm429, %v494, 0
        %606 = vmatpush.bf16.msra.mxu0 %v583
        %607 = vmatpush.bf16.msra.mxu0 %v582
        %608 = vmatpush.bf16.msra.mxu0 %v581
        %609 = vmatpush.bf16.msra.mxu0 %v580
        %610 = vmatpush.bf16.msra.mxu0 %v579
        %611 = vmatpush.bf16.msra.mxu0 %v578
        %612 = vmatpush.bf16.msra.mxu0 %v577
        %613 = vmatpush.bf16.msra.mxu0 %v576
        %614 = vmatmul.bf16.gmra.mxu0 %v497
        %v615 = vpop.f32.mrf.mxu0
        %v616 = vadd.f32 0.0, %v615
        %v617 = vpop.f32.mrf.mxu0
        %v618 = vadd.f32 0.0, %v617
        %619 = vmatmul.bf16.gmra.mxu0 %v501
        %v620 = vpop.f32.mrf.mxu0
        %v621 = vadd.f32 0.0, %v620
        %v622 = vpop.f32.mrf.mxu0
        %v623 = vadd.f32 0.0, %v622
        %624 = vdwg.mxu0
        %625 = vmatpush.bf16.msra.mxu0 0
        %626 = vmatpush.bf16.msra.mxu0 0
        %627 = vmatpush.bf16.msra.mxu0 0
        %628 = vmatpush.bf16.msra.mxu0 0
        %629 = vmatpush.bf16.msra.mxu0 %v587
        %630 = vmatpush.bf16.msra.mxu0 %v586
        %631 = vmatpush.bf16.msra.mxu0 %v585
        %632 = vmatpush.bf16.msra.mxu0 %v584
        %633 = vmatmul.bf16.gmra.mxu0 %v601
        %v634 = vpop.f32.mrf.mxu0
        %v635 = vadd.f32 %v616, %v634
        %v636 = vpop.f32.mrf.mxu0
        %v637 = vadd.f32 %v618, %v636
        %638 = vmatmul.bf16.gmra.mxu0 %v604
        %v639 = vpop.f32.mrf.mxu0
        %v640 = vadd.f32 %v621, %v639
        %v641 = vpop.f32.mrf.mxu0
        %v642 = vadd.f32 %v623, %v641
        %643 = vdwg.mxu0
        %v668 = vunpack.c.l.b16 %v438
        %v669 = vunpack.c.l.b16 %v439
        %v670 = vunpack.c.l.b16 %v440
        %v671 = vunpack.c.l.b16 %v441
        %v672 = vunpack.c.l.b16 %v442
        %v673 = vunpack.c.l.b16 %v443
        %v674 = vunpack.c.l.b16 %v444
        %v675 = vunpack.c.l.b16 %v445
        %v676 = vunpack.c.l.b16 %v446
        %v677 = vunpack.c.l.b16 %v447
        %v678 = vunpack.c.l.b16 %v448
        %v679 = vunpack.c.l.b16 %v449
        %v680 = vunpack.c.l.b16 %v450
        %v681 = vunpack.c.l.b16 %v451
        %v682 = vunpack.c.l.b16 %v452
        %v683 = vunpack.c.l.b16 %v453
        %v684 = vunpack.c.l.b16 %v454
        %v685 = vunpack.c.l.b16 %v455
        %v686 = vunpack.c.l.b16 %v456
        %v687 = vunpack.c.l.b16 %v457
        %v688 = vunpack.c.l.b16 %v458
        %v689 = vunpack.c.l.b16 %v459
        %v690 = vunpack.c.l.b16 %v460
        %v691 = vunpack.c.l.b16 %v461
        %v692 = vpack.c.b16 %v669, %v668
        %v693 = vpack.c.b16 %v671, %v670
        %v694 = vpack.c.b16 %v673, %v672
        %v695 = vpack.c.b16 %v675, %v674
        %v696 = vpack.c.b16 %v677, %v676
        %v697 = vpack.c.b16 %v679, %v678
        %v698 = vpack.c.b16 %v681, %v680
        %v699 = vpack.c.b16 %v683, %v682
        %v700 = vpack.c.b16 %v685, %v684
        %v701 = vpack.c.b16 %v687, %v686
        %v702 = vpack.c.b16 %v689, %v688
        %v703 = vpack.c.b16 %v691, %v690
        %v717 = vsel %vm429, %v427, 0
        %v720 = vsel %vm429, %v428, 0
        %722 = vmatpush.bf16.msra.mxu0 %v699
        %723 = vmatpush.bf16.msra.mxu0 %v698
        %724 = vmatpush.bf16.msra.mxu0 %v697
        %725 = vmatpush.bf16.msra.mxu0 %v696
        %726 = vmatpush.bf16.msra.mxu0 %v695
        %727 = vmatpush.bf16.msra.mxu0 %v694
        %728 = vmatpush.bf16.msra.mxu0 %v693
        %729 = vmatpush.bf16.msra.mxu0 %v692
        %730 = vmatmul.bf16.gmra.mxu0 %v432
        %v731 = vpop.f32.mrf.mxu0
        %v732 = vadd.f32 %v635, %v731
        %v733 = vpop.f32.mrf.mxu0
        %v734 = vadd.f32 %v637, %v733
        %735 = vmatmul.bf16.gmra.mxu0 %v436
        %v736 = vpop.f32.mrf.mxu0
        %v737 = vadd.f32 %v640, %v736
        %v738 = vpop.f32.mrf.mxu0
        %v739 = vadd.f32 %v642, %v738
        %740 = vdwg.mxu0
        %741 = vmatpush.bf16.msra.mxu0 0
        %742 = vmatpush.bf16.msra.mxu0 0
        %743 = vmatpush.bf16.msra.mxu0 0
        %744 = vmatpush.bf16.msra.mxu0 0
        %745 = vmatpush.bf16.msra.mxu0 %v703
        %746 = vmatpush.bf16.msra.mxu0 %v702
        %747 = vmatpush.bf16.msra.mxu0 %v701
        %748 = vmatpush.bf16.msra.mxu0 %v700
        %749 = vmatmul.bf16.gmra.mxu0 %v717
        %v750 = vpop.f32.mrf.mxu0
        %v751 = vadd.f32 %v732, %v750
        %v752 = vpop.f32.mrf.mxu0
        %v753 = vadd.f32 %v734, %v752
        %754 = vmatmul.bf16.gmra.mxu0 %v720
        %v755 = vpop.f32.mrf.mxu0
        %v756 = vadd.f32 %v737, %v755
        %v757 = vpop.f32.mrf.mxu0
        %v758 = vadd.f32 %v739, %v757
        %759 = vdwg.mxu0
        %v761 = vshrl.u32 %v319, 16
        %v763 = vrot.slane %v761, 4
        %v764 = vshll.u32 %v319, 16
        %v766 = vrot.slane %v764, 5
        %v767 = vor.u32 %v763, %v766
        %v768 = vrot.slane %v767, 4
        %v770 = vshll.u32 %v320, 16
        %v772 = vrot.slane %v770, 5
        %v773 = vsel %vm323, %v768, %v772
        %v776 = vrot.slane %v319, 5
        %v777 = vrot.slane %v776, 4
        %v778 = vrot.slane %v320, 5
        %v779 = vsel %vm390, %v777, %v778
        %v780 = vunpack.c.l.b16 %v319
        %v781 = vpack.c.b16 %v780, %v482
        %v782 = vunpack.c.l.b16 %v773
        %v783 = vpack.c.b16 %v782, %v485
        %784 = vrot.lane.b32.xlu0 %v783, 64
        %v785 = vpop.permute.xlu0 %784
        %v786 = vunpack.c.l.b16 %v779
        %v787 = vpack.c.b16 %v786, %v492
        %v790 = vsel %vm429, %v781, %v785
        %s792 = scalar_lea.vmem %s2, 192
        %v793 = vld [vmem:[%s792] sm:$0xf]
        %v794 = vld [vmem:[%s792 + $0x4] sm:$0xf]
        %v795 = vld [vmem:[%s792 + $0x8] sm:$0xf]
        %v796 = vld [vmem:[%s792 + $0xc] sm:$0xf]
        %v797 = vld [vmem:[%s792 + $0x10] sm:$0xf]
        %v798 = vld [vmem:[%s792 + $0x14] sm:$0xf]
        %v799 = vld [vmem:[%s792 + $0x18] sm:$0xf]
        %v800 = vld [vmem:[%s792 + $0x1c] sm:$0xf]
        %v801 = vld [vmem:[%s792 + $0x20] sm:$0xf]
        %v802 = vld [vmem:[%s792 + $0x24] sm:$0xf]
        %v803 = vld [vmem:[%s792 + $0x28] sm:$0xf]
        %v804 = vld [vmem:[%s792 + $0x2c] sm:$0xf]
        %v805 = vld [vmem:[%s792 + $0x30] sm:$0xf]
        %v806 = vld [vmem:[%s792 + $0x34] sm:$0xf]
        %v807 = vld [vmem:[%s792 + $0x38] sm:$0xf]
        %v808 = vld [vmem:[%s792 + $0x3c] sm:$0xf]
        %v809 = vld [vmem:[%s792 + $0x40] sm:$0xf]
        %v810 = vld [vmem:[%s792 + $0x44] sm:$0xf]
        %v811 = vld [vmem:[%s792 + $0x48] sm:$0xf]
        %v812 = vld [vmem:[%s792 + $0x4c] sm:$0xf]
        %v813 = vld [vmem:[%s792 + $0x50] sm:$0xf]
        %v814 = vld [vmem:[%s792 + $0x54] sm:$0xf]
        %v815 = vld [vmem:[%s792 + $0x58] sm:$0xf]
        %v816 = vld [vmem:[%s792 + $0x5c] sm:$0xf]
        %v841 = vunpack.c.l.b16 %v793
        %v842 = vunpack.c.l.b16 %v794
        %v843 = vunpack.c.l.b16 %v795
        %v844 = vunpack.c.l.b16 %v796
        %v845 = vunpack.c.l.b16 %v797
        %v846 = vunpack.c.l.b16 %v798
        %v847 = vunpack.c.l.b16 %v799
        %v848 = vunpack.c.l.b16 %v800
        %v849 = vunpack.c.l.b16 %v801
        %v850 = vunpack.c.l.b16 %v802
        %v851 = vunpack.c.l.b16 %v803
        %v852 = vunpack.c.l.b16 %v804
        %v853 = vunpack.c.l.b16 %v805
        %v854 = vunpack.c.l.b16 %v806
        %v855 = vunpack.c.l.b16 %v807
        %v856 = vunpack.c.l.b16 %v808
        %v857 = vunpack.c.l.b16 %v809
        %v858 = vunpack.c.l.b16 %v810
        %v859 = vunpack.c.l.b16 %v811
        %v860 = vunpack.c.l.b16 %v812
        %v861 = vunpack.c.l.b16 %v813
        %v862 = vunpack.c.l.b16 %v814
        %v863 = vunpack.c.l.b16 %v815
        %v864 = vunpack.c.l.b16 %v816
        %v865 = vpack.c.b16 %v842, %v841
        %v866 = vpack.c.b16 %v844, %v843
        %v867 = vpack.c.b16 %v846, %v845
        %v868 = vpack.c.b16 %v848, %v847
        %v869 = vpack.c.b16 %v850, %v849
        %v870 = vpack.c.b16 %v852, %v851
        %v871 = vpack.c.b16 %v854, %v853
        %v872 = vpack.c.b16 %v856, %v855
        %v873 = vpack.c.b16 %v858, %v857
        %v874 = vpack.c.b16 %v860, %v859
        %v875 = vpack.c.b16 %v862, %v861
        %v876 = vpack.c.b16 %v864, %v863
        %v890 = vsel %vm429, %v787, 0
        %892 = vmatpush.bf16.msra.mxu0 %v872
        %893 = vmatpush.bf16.msra.mxu0 %v871
        %894 = vmatpush.bf16.msra.mxu0 %v870
        %895 = vmatpush.bf16.msra.mxu0 %v869
        %896 = vmatpush.bf16.msra.mxu0 %v868
        %897 = vmatpush.bf16.msra.mxu0 %v867
        %898 = vmatpush.bf16.msra.mxu0 %v866
        %899 = vmatpush.bf16.msra.mxu0 %v865
        %900 = vmatmul.bf16.gmra.mxu0 %v436
        %v901 = vpop.f32.mrf.mxu0
        %v902 = vadd.f32 0.0, %v901
        %v903 = vpop.f32.mrf.mxu0
        %v904 = vadd.f32 0.0, %v903
        %905 = vmatmul.bf16.gmra.mxu0 %v790
        %v906 = vpop.f32.mrf.mxu0
        %v907 = vadd.f32 0.0, %v906
        %v908 = vpop.f32.mrf.mxu0
        %v909 = vadd.f32 0.0, %v908
        %910 = vdwg.mxu0
        %911 = vmatpush.bf16.msra.mxu0 0
        %912 = vmatpush.bf16.msra.mxu0 0
        %913 = vmatpush.bf16.msra.mxu0 0
        %914 = vmatpush.bf16.msra.mxu0 0
        %915 = vmatpush.bf16.msra.mxu0 %v876
        %916 = vmatpush.bf16.msra.mxu0 %v875
        %917 = vmatpush.bf16.msra.mxu0 %v874
        %918 = vmatpush.bf16.msra.mxu0 %v873
        %919 = vmatmul.bf16.gmra.mxu0 %v720
        %v920 = vpop.f32.mrf.mxu0
        %v921 = vadd.f32 %v902, %v920
        %v922 = vpop.f32.mrf.mxu0
        %v923 = vadd.f32 %v904, %v922
        %924 = vmatmul.bf16.gmra.mxu0 %v890
        %v925 = vpop.f32.mrf.mxu0
        %v926 = vadd.f32 %v907, %v925
        %v927 = vpop.f32.mrf.mxu0
        %v928 = vadd.f32 %v909, %v927
        %929 = vdwg.mxu0
        %v930 = vadd.f32 %v751, %v921
        %v931 = vadd.f32 %v753, %v923
        %v932 = vadd.f32 %v756, %v926
        %v933 = vadd.f32 %v758, %v928
        %v934 = vld [vmem:[%s3] sm:$0x1]
        %v936 = vperm.slane %v934, 0
        %v938 = vadd.f32 %v930, %v936
        %v939 = vadd.f32 %v931, %v936
        %v940 = vadd.f32 %v932, %v936
        %v941 = vadd.f32 %v933, %v936
        %v942 = vpack.c.bf16 %v938, %v938
        %v943 = vpack.c.bf16 %v939, %v939
        %v944 = vpack.c.bf16 %v940, %v940
        %v945 = vpack.c.bf16 %v941, %v941
        %946 = vst [vmem:[%s270] sm:$0xf] %v942
        %947 = vst [vmem:[%s270 + $0x4] sm:$0xf] %v943
        %948 = vst [vmem:[%s270 + $0x8] sm:$0xf] %v944
        %949 = vst [vmem:[%s270 + $0xc] sm:$0xf] %v945
        %s950 = sand.u32 %s142, 1
        %s951 = scalar_lea.sflag [#allocation3], %s950
        %s952 = sand.u32 %s142, 1
        %s953 = smul.addr %s952, 16
        %s954 = scalar_lea.vmem [#allocation2], %s953
        // Predicated region
        $region37: #{tpu_custom_call.1} parent=35 // pred_check
          %p955 = pneg %p152
        $region38: #{tpu_custom_call.1} parent=35 // pred_check_branch
          %957 = sbr.rel (%p955) target = $region40
        $region39: #{tpu_custom_call.1} parent=35 // pred_region
          %s958 = smul.u32 4, %s23
          %960 = vsyncadd %s951, 0
          %s961 = smul.addr %s22, 8
          %s962 = sadd.s32 %s958, %s961
          %s963 = smul.addr %s962, 4
          %s964 = scalar_lea.hbm %s4, %s963
          %s965 = sshll.u32 %s954, 4
          %s966 = int_to_ptr.vmem [resolvable:$true] %s965
          %s967 = sshll.u32 %s964, 4
          %s968 = int_to_ptr.hbm [resolvable:$true] %s967
          %973 = dma.vmem_to_hbm [thread:$0]  %s966, 256, %s968, %s951, 64, 64, 4
        $region40: #{tpu_custom_call.1} parent=35 // pred_fallthru
          _
      $region36: #{tpu_custom_call.1} parent=5 // pred_fallthru
        _
      %p974 = scmp.le.s32.totalorder 2, %s13
      // Predicated region
      $region41: #{tpu_custom_call.1} parent=5 // pred_check
        %p975 = pneg %p974
      $region42: #{tpu_custom_call.1} parent=5 // pred_check_branch
        %977 = sbr.rel (%p975) target = $region44
      $region43: #{tpu_custom_call.1} parent=5 // pred_region
        %s978 = ssub.s32 %s13, 2
        // Predicated region
        $region45: #{tpu_custom_call.1} parent=43 // pred_check
          %p979 = pneg %p158
        $region46: #{tpu_custom_call.1} parent=43 // pred_check_branch
          %981 = sbr.rel (%p979) target = $region48
        $region47: #{tpu_custom_call.1} parent=43 // pred_region
          %s982 = sand.u32 %s143, 1
          %s983 = scalar_lea.sflag [#allocation3], %s982
          %s984 = sand.u32 %s143, 1
          %s985 = smul.addr %s984, 16
          %s986 = scalar_lea.vmem [#allocation2], %s985
          %988 = dma.done %s983, 256
        $region48: #{tpu_custom_call.1} parent=43 // pred_fallthru
          _
      $region44: #{tpu_custom_call.1} parent=5 // pred_fallthru
        _
    $region6: #{tpu_custom_call.1} parent=1 // loop_footer
      %s17 = sadd.s32 1, %s13
    $region7: #{tpu_custom_call.1} parent=1 // loop_footer_branch
      %12 = sbr.rel target = $region3
    $region8: #{tpu_custom_call.1} parent=1 // loop_exit
      _
    %989 = vsyncpa [#allocation3], 1
    %s990 = scalar_lea.sflag [#allocation3], 1
    %991 = vsyncpa %s990, 1

</llo_original>
